<compile_context>
chip_gen: v7x
topology: tpu7x:2x2x1
jax: 0.10.0
libtpu: 0.0.40
codegen_flags: <defaults>
</compile_context>

<pallas_src>
import jax
import jax.numpy as jnp
from jax.experimental import pallas as pl
from jax.experimental.pallas import tpu as pltpu


def _make_concat_pe_kernel(d: int):
    """out[:, :, :d] = x ; out[:, :, d:] = pe broadcast over batch."""
    def kernel(x_ref, pe_ref, out_ref):
        # x_ref  : (bb, tt, d)
        # pe_ref : (1,  tt, dim_pos)   -- resident across the inner batch loop
        # out_ref: (bb, tt, d + dim_pos)
        bb = out_ref.shape[0]
        out_ref[:, :, :d] = x_ref[...]
        pe = pe_ref[...]
        out_ref[:, :, d:] = jnp.broadcast_to(pe, (bb,) + pe.shape[1:])
    return kernel


def _sublane_tile(dtype) -> int:
    """Second-minor (sublane) tile for a dtype: f32->8, bf16->16, int8/fp8->32."""
    return {4: 8, 2: 16, 1: 32}.get(jnp.dtype(dtype).itemsize, 8)


def _padded_block_bytes(shape, dtype) -> int:
    """VMEM bytes of one buffer of `shape`, with (sublane, lane) tile padding."""
    itemsize = jnp.dtype(dtype).itemsize
    sub = _sublane_tile(dtype)
    *lead, s, l = shape
    s_p = -(-s // sub) * sub
    l_p = -(-l // 128) * 128
    n = 1
    for v in lead:
        n *= int(v)
    return n * s_p * l_p * itemsize


def _vmem_budget_bytes():
    """(tile-footprint budget, vmem_limit_bytes) per TPU generation."""
    kind = ""
    try:
        kind = jax.devices()[0].device_kind.lower()
    except Exception:            # no device info -> most conservative numbers
        pass
    if "v5 lite" in kind or "v5e" in kind or "v5lite" in kind:
        return 10 << 20, 16 << 20      # v5e: 16 MiB scoped default, ~820 GB/s HBM
    if "v6" in kind:
        return 22 << 20, 32 << 20      # v6e: 32 MiB scoped / 128 MiB physical
    if "v7" in kind or "tpu7" in kind or "7x" in kind:
        return 18 << 20, 32 << 20      # v7x: 32 MiB scoped / only 64 MiB physical
    return 10 << 20, 16 << 20          # unknown (v4/v5p/...): stay conservative


def _choose_blocks(b: int, t: int, d: int, dim_pos: int, dtype):
    """Pick (bb, tt, vmem_limit): biggest blocks fitting the generation-aware
    VMEM budget (padding-aware), with >= 2 grid steps whenever splittable."""
    budget, vmem_limit = _vmem_budget_bytes()
    sub = _sublane_tile(dtype)

    def footprint(bb, tt):
        return (2 * _padded_block_bytes((bb, tt, d), dtype)               # x   (double-buffered)
                + 1 * _padded_block_bytes((1, tt, dim_pos), dtype)        # pe  (single-buffered)
                + 2 * _padded_block_bytes((bb, tt, d + dim_pos), dtype))  # out (double-buffered)

    bb, tt = b, t
    # Shrink the batch block first (keeps whole sequences together), then the
    # sequence block (always a multiple of the sublane tile, or the full t).
    while bb > 1 and footprint(bb, tt) > budget:
        bb = (bb + 1) // 2
    while tt > sub and footprint(bb, tt) > budget:
        tt = max(sub, ((tt // 2 + sub - 1) // sub) * sub)

    # v7x has 2 TensorCores: ensure the parallel grid has >= 2 steps when the
    # problem is splittable, so both cores stream this bandwidth-bound copy.
    if pl.cdiv(b, bb) * pl.cdiv(t, tt) < 2:
        if b >= 2:
            bb = (b + 1) // 2
        elif t >= 2 * sub:
            tt = max(sub, ((t // 2 + sub - 1) // sub) * sub)

    # Fallback for pathologically large d: even the minimal block overshoots
    # the budget -> request more scoped VMEM instead of failing outright.
    need = footprint(bb, tt)
    if need > budget:
        vmem_limit = max(vmem_limit, min(need + (4 << 20), 48 << 20))

    return bb, tt, vmem_limit


def learned_pe_concatenate(x: jax.Array, pe_layer: jax.Array,
                           wn_s: int, wn_e: int) -> jax.Array:
    """x: (b, t, d); pe_layer: (1, max_len, dim_pos) -> (b, t, d + dim_pos)."""
    b, t, d = x.shape
    dim_pos = pe_layer.shape[-1]
    assert wn_e - wn_s == t, "window length must equal sequence length"

    # Static slice of the learned table.  Output dtype follows x (torch.cat
    # requires matching dtypes; the module keeps pe in the compute dtype).
    pe_window = pe_layer[:, wn_s:wn_e, :].astype(x.dtype)     # (1, t, dim_pos)

    bb, tt, vmem_limit = _choose_blocks(b, t, d, dim_pos, x.dtype)
    # t-blocks outer, batch-blocks inner: pe block index is constant over the
    # inner axis, so it stays resident and is fetched only once per t-block.
    grid = (pl.cdiv(t, tt), pl.cdiv(b, bb))

    return pl.pallas_call(
        _make_concat_pe_kernel(d),
        out_shape=jax.ShapeDtypeStruct((b, t, d + dim_pos), x.dtype),
        grid_spec=pltpu.PrefetchScalarGridSpec(
            num_scalar_prefetch=0,
            grid=grid,
            in_specs=[
                # batch x seq chunk of x; last dim is always the full d
                pl.BlockSpec((bb, tt, d), lambda j, i: (i, j, 0)),
                # pe: constant block index across the inner (batch) axis and
                # tiny -> single buffer is enough (frees VMEM + a DMA slot)
                pl.BlockSpec((1, tt, dim_pos), lambda j, i: (0, j, 0),
                             pipeline_mode=pl.Buffered(1)),
            ],
            out_specs=pl.BlockSpec((bb, tt, d + dim_pos), lambda j, i: (i, j, 0)),
        ),
        compiler_params=pltpu.CompilerParams(
            dimension_semantics=("parallel", "parallel"),
            vmem_limit_bytes=vmem_limit),
    )(x, pe_window)


if __name__ == "__main__":
    # Module hyper-params (small; d and dim_pos chosen 128-lane aligned so both
    # output stores are unmasked -- the documented biggest lever for this
    # store-bound kernel).  Unaligned d also works (masked boundary store),
    # and is exercised below with the original toy config.
    max_len = 16
    dim_pos = 128
    wn_s, wn_e = 4, 12                    # window length == seq_len == 8
    b, t, d = 2, wn_e - wn_s, 128

    key = jax.random.PRNGKey(0)
    kx, kpe = jax.random.split(key)

    x = jax.random.normal(kx, (b, t, d), dtype=jnp.float32)
    # deterministic stand-in for nn.Parameter(torch.randn(1, max_len, dim_pos))
    pe_layer = jax.random.normal(kpe, (1, max_len, dim_pos), dtype=jnp.float32)

    out = jax.block_until_ready(learned_pe_concatenate(x, pe_layer, wn_s, wn_e))

    pe_ref = jnp.broadcast_to(pe_layer[:, wn_s:wn_e, :], (b, t, dim_pos))
    ref = jnp.concatenate((x, pe_ref), axis=-1)
    assert out.shape == (b, t, d + dim_pos)
    assert jnp.allclose(out, ref), "mismatch vs reference (lane-aligned case)"

    # Lane-unaligned path from the original toy config (d = dim_pos = 32).
    d2, dim_pos2 = 32, 32
    x2 = jax.random.normal(kx, (b, t, d2), dtype=jnp.float32)
    pe_layer2 = jax.random.normal(kpe, (1, max_len, dim_pos2), dtype=jnp.float32)
    out2 = jax.block_until_ready(learned_pe_concatenate(x2, pe_layer2, wn_s, wn_e))
    ref2 = jnp.concatenate(
        (x2, jnp.broadcast_to(pe_layer2[:, wn_s:wn_e, :], (b, t, dim_pos2))),
        axis=-1)
    assert jnp.allclose(out2, ref2), "mismatch vs reference (unaligned case)"

    print("KERNEL_OK")
</pallas_src>

<mosaic_0001>
module attributes {stable_mosaic.version = 11 : i64} {
  func.func @kernel(%arg0: i32, %arg1: i32, %arg2: memref<1x8x128xf32, #tpu.memory_space<vmem>>, %arg3: memref<1x8x128xf32, #tpu.memory_space<vmem>>, %arg4: memref<1x8x256xf32, #tpu.memory_space<vmem>>) attributes {dimension_semantics = [#tpu.dimension_semantics<parallel>, #tpu.dimension_semantics<parallel>], iteration_bounds = array<i64: 1, 2>, scalar_prefetch = 0 : i64, scratch_operands = 0 : i64, tpu.core_type = #tpu.core_type<tc>, window_params = [{transform_indices = @transform_0, window_bounds = array<i64: 1, 8, 128>}, {pipeline_mode = #tpu.pipeline_mode<synchronous>, transform_indices = @transform_1, window_bounds = array<i64: 1, 8, 128>}, {transform_indices = @transform_2, window_bounds = array<i64: 1, 8, 256>}]} {
    %c0 = arith.constant 0 : index
    %c0_0 = arith.constant 0 : index
    %c0_1 = arith.constant 0 : index
    %0 = vector.load %arg2[%c0, %c0_0, %c0_1] : memref<1x8x128xf32, #tpu.memory_space<vmem>>, vector<1x8x128xf32>
    %c0_2 = arith.constant 0 : index
    %c0_3 = arith.constant 0 : index
    %c0_4 = arith.constant 0 : index
    %1 = vector.load %arg4[%c0_2, %c0_3, %c0_4] : memref<1x8x256xf32, #tpu.memory_space<vmem>>, vector<1x8x128xf32>
    tpu.vector_store %arg4[%c0_2, %c0_3, %c0_4], %0 {strides = array<i32>} : memref<1x8x256xf32, #tpu.memory_space<vmem>>, vector<1x8x128xf32>,
    %c0_5 = arith.constant 0 : index
    %c0_6 = arith.constant 0 : index
    %c0_7 = arith.constant 0 : index
    %2 = vector.load %arg3[%c0_5, %c0_6, %c0_7] : memref<1x8x128xf32, #tpu.memory_space<vmem>>, vector<1x8x128xf32>
    %c0_8 = arith.constant 0 : index
    %c0_9 = arith.constant 0 : index
    %c128 = arith.constant 128 : index
    %3 = vector.load %arg4[%c0_8, %c0_9, %c128] : memref<1x8x256xf32, #tpu.memory_space<vmem>>, vector<1x8x128xf32>
    tpu.vector_store %arg4[%c0_8, %c0_9, %c128], %2 {strides = array<i32>} : memref<1x8x256xf32, #tpu.memory_space<vmem>>, vector<1x8x128xf32>,
    return
  }
  func.func @transform_0(%arg0: i32, %arg1: i32) -> (i32, i32, i32) {
    %c0_i32 = arith.constant 0 : i32
    %c0_i32_0 = arith.constant 0 : i32
    return %arg1, %arg0, %c0_i32 : i32, i32, i32
  }
  func.func @transform_1(%arg0: i32, %arg1: i32) -> (i32, i32, i32) {
    %c0_i32 = arith.constant 0 : i32
    %c0_i32_0 = arith.constant 0 : i32
    %c0_i32_1 = arith.constant 0 : i32
    return %c0_i32, %arg0, %c0_i32_0 : i32, i32, i32
  }
  func.func @transform_2(%arg0: i32, %arg1: i32) -> (i32, i32, i32) {
    %c0_i32 = arith.constant 0 : i32
    %c0_i32_0 = arith.constant 0 : i32
    return %arg1, %arg0, %c0_i32 : i32, i32, i32
  }
}

</mosaic_0001>

<llo_original>
// kernel: tpu_custom_call.1
$region0: #{tpu_custom_call.1}
  #allocation0 [shape = 'u32[]', space=smem, size = 0x4, offset = 0x4, fixed_abs, tag = 'smem constant byte address 0x4 - core index']
  #allocation1 [shape = 'u32[144,128]{1,0:T(1,128)}', space=vmem, size = 0x12000, scoped, tag = 'internal scratch']
  %s0 = inlined_call_operand.hbm [shape: f32[2,8,128], index: 0, kind: input, shape index: {}]
  %s1 = inlined_call_operand.hbm [shape: f32[1,8,128], index: 1, kind: input, shape index: {}]
  %s2 = inlined_call_operand.hbm [shape: f32[2,8,256], index: 2, kind: output, shape index: {}]
  %s3 = sld [smem:[#allocation0]]
  $region49: #{tpu_custom_call.1} parent=0
    _
  %s5 = ssub.s32 1, %s3
  %s6 = scalar_select 0, %s5, %s3
  $region1: #{tpu_custom_call.1} parent=0
    #allocation2 [shape = 'u8[8192]{0}', space=vmem, size = 0x2000, scoped, tag = 'input window, operand 0']
    #allocation3 [shape = 's32[2]{0}', space=sflag, size = 0x8, scoped, tag = 'scoped memory for tpu_custom_call.1']
    #allocation4 [shape = 's32[2]{0}', space=sflag, size = 0x8, scoped, tag = 'scoped memory for tpu_custom_call.1']
    #allocation5 [shape = 'u8[4096]{0}', space=vmem, size = 0x1000, scoped, tag = 'input window, operand 1, single buffered']
    #allocation6 [shape = 's32[1]{0}', space=sflag, size = 0x4, scoped, tag = 'scoped memory for tpu_custom_call.1']
    #allocation7 [shape = 'u8[16384]{0}', space=vmem, size = 0x4000, scoped, tag = 'output window, operand 0']
    %7 = vsyncpa [#allocation3], 0
    %s8 = scalar_lea.sflag [#allocation3], 1
    %9 = vsyncpa %s8, 0
    %10 = vsyncpa [#allocation6], 0
    %11 = vsyncpa [#allocation4], 0
    %s12 = scalar_lea.sflag [#allocation4], 1
    %13 = vsyncpa %s12, 0
    loop: start=0, step=1, limit=4
    $region2: #{tpu_custom_call.1} parent=1 // loop_pre_header
      _
    $region3: #{tpu_custom_call.1} parent=1 // loop_header
      %s15 = sphi 0, %s19
      %p16 = scmp.ge.s32.totalorder %s15, 4
      %s22 = sphi 0, %s34
      %s23 = sphi 0, %s30
      %s24 = sphi 0, %s22
      %s25 = sphi 0, %s23
      %s26 = sphi 0, %s24
      %s27 = sphi 0, %s25
      %s39 = sphi 0, %s41
      %s42 = sphi 0, %s39
      %s43 = sphi 0, %s42
      %s59 = sphi 0, %s43
      %s65 = sphi 0, %s67
      %s68 = sphi 0, %s65
      %s69 = sphi 0, %s68
      %s85 = sphi 0, %s69
      %s93 = sphi 0, %s95
      %s96 = sphi 0, %s93
      %s97 = sphi 0, %s96
      %s113 = sphi 0, %s97
    $region4: #{tpu_custom_call.1} parent=1 // loop_header_branch
      %18 = sbr.rel (%p16) target = $region8
    $region5: #{tpu_custom_call.1} parent=1 // loop_body
      %s20 = ssub.s32 %s15, 1
      %s21 = ssub.s32 %s15, 2
      %s28 = sadd.s32 1, %s23
      %p29 = scmp.ge.s32.totalorder %s28, 2
      %s30 = scalar_select %p29, 0, %s28
      %s31 = sadd.s32 1, %s22
      %s32 = scalar_select %p29, %s31, %s22
      %p33 = scmp.ge.s32.totalorder %s32, 1
      %s34 = scalar_select %p33, 0, %s32
      %s35 = ssub.s32 %s23, %s30
      %s36 = ssub.s32 %s22, %s34
      %s37 = sor.u32 %s35, %s36
      %p38 = scmp.eq.s32.totalorder %s37, 0
      %s40 = sadd.s32 %s39, 1
      %s41 = scalar_select %p38, %s39, %s40
      %p44 = pneg %p38
      %p45 = scmp.eq.s32.totalorder %s15, 1
      %p46 = por %p44, %p45
      %p47 = scmp.ne.s32.totalorder %s39, %s42
      %p48 = scmp.eq.s32.totalorder %s15, 0
      %p49 = por %p47, %p48
      %p50 = scmp.ne.s32.totalorder %s39, %s42
      %p51 = scmp.eq.s32.totalorder %s20, 1
      %p52 = por %p50, %p51
      %p53 = scmp.ne.s32.totalorder %s42, %s43
      %p54 = scmp.eq.s32.totalorder %s20, 0
      %p55 = por %p53, %p54
      %p56 = scmp.ne.s32.totalorder %s42, %s43
      %p57 = scmp.eq.s32.totalorder %s21, 1
      %p58 = por %p56, %p57
      %p60 = scmp.ne.s32.totalorder %s43, %s59
      %p61 = scmp.eq.s32.totalorder %s21, 0
      %p62 = por %p60, %p61
      %s63 = ssub.s32 %s22, %s34
      %p64 = scmp.eq.s32.totalorder %s63, 0
      %s66 = sadd.s32 %s65, 1
      %s67 = scalar_select %p64, %s65, %s66
      %p70 = pneg %p64
      %p71 = scmp.eq.s32.totalorder %s15, 1
      %p72 = por %p70, %p71
      %p73 = scmp.ne.s32.totalorder %s65, %s68
      %p74 = scmp.eq.s32.totalorder %s15, 0
      %p75 = por %p73, %p74
      %p76 = scmp.ne.s32.totalorder %s65, %s68
      %p77 = scmp.eq.s32.totalorder %s20, 1
      %p78 = por %p76, %p77
      %p79 = scmp.ne.s32.totalorder %s68, %s69
      %p80 = scmp.eq.s32.totalorder %s20, 0
      %p81 = por %p79, %p80
      %p82 = scmp.ne.s32.totalorder %s68, %s69
      %p83 = scmp.eq.s32.totalorder %s21, 1
      %p84 = por %p82, %p83
      %p86 = scmp.ne.s32.totalorder %s69, %s85
      %p87 = scmp.eq.s32.totalorder %s21, 0
      %p88 = por %p86, %p87
      %s89 = ssub.s32 %s23, %s30
      %s90 = ssub.s32 %s22, %s34
      %s91 = sor.u32 %s89, %s90
      %p92 = scmp.eq.s32.totalorder %s91, 0
      %s94 = sadd.s32 %s93, 1
      %s95 = scalar_select %p92, %s93, %s94
      %p98 = pneg %p92
      %p99 = scmp.eq.s32.totalorder %s15, 1
      %p100 = por %p98, %p99
      %p101 = scmp.ne.s32.totalorder %s93, %s96
      %p102 = scmp.eq.s32.totalorder %s15, 0
      %p103 = por %p101, %p102
      %p104 = scmp.ne.s32.totalorder %s93, %s96
      %p105 = scmp.eq.s32.totalorder %s20, 1
      %p106 = por %p104, %p105
      %p107 = scmp.ne.s32.totalorder %s96, %s97
      %p108 = scmp.eq.s32.totalorder %s20, 0
      %p109 = por %p107, %p108
      %p110 = scmp.ne.s32.totalorder %s96, %s97
      %p111 = scmp.eq.s32.totalorder %s21, 1
      %p112 = por %p110, %p111
      %p114 = scmp.ne.s32.totalorder %s97, %s113
      %p115 = scmp.eq.s32.totalorder %s21, 0
      %p116 = por %p114, %p115
      %p117 = scmp.le.s32.totalorder 1, %s15
      %p118 = scmp.lt.s32.totalorder %s15, 3
      %p119 = pnand %p117, %p118
      %p120 = pneg %p119
      // Predicated region
      $region9: #{tpu_custom_call.1} parent=5 // pred_check
        _
      $region10: #{tpu_custom_call.1} parent=5 // pred_check_branch
        %122 = sbr.rel (%p119) target = $region12
      $region11: #{tpu_custom_call.1} parent=5 // pred_region
        %s123 = ssub.s32 %s15, 1
        // Predicated region
        $region13: #{tpu_custom_call.1} parent=11 // pred_check
          %p124 = pneg %p81
        $region14: #{tpu_custom_call.1} parent=11 // pred_check_branch
          %126 = sbr.rel (%p124) target = $region16
        $region15: #{tpu_custom_call.1} parent=11 // pred_region
          %s128 = ssub.s32 128, 128
          %129 = vsyncadd [#allocation6], %s128
          %s130 = smul.addr %s24, 128
          %s131 = scalar_lea.hbm %s1, %s130
          %s133 = sshll.u32 [#allocation5], 4
          %s134 = int_to_ptr.vmem [resolvable:$true] %s133
          %136 = dma.hbm_to_vmem [thread:$0]  %s131, 128, %s134, [#allocation6]
        $region16: #{tpu_custom_call.1} parent=11 // pred_fallthru
          _
      $region12: #{tpu_custom_call.1} parent=5 // pred_fallthru
        _
      %p137 = scmp.lt.s32.totalorder %s15, 2
      // Predicated region
      $region17: #{tpu_custom_call.1} parent=5 // pred_check
        %p138 = pneg %p137
      $region18: #{tpu_custom_call.1} parent=5 // pred_check_branch
        %140 = sbr.rel (%p138) target = $region20
      $region19: #{tpu_custom_call.1} parent=5 // pred_region
        // Predicated region
        $region21: #{tpu_custom_call.1} parent=19 // pred_check
          %p141 = pneg %p49
        $region22: #{tpu_custom_call.1} parent=19 // pred_check_branch
          %143 = sbr.rel (%p141) target = $region24
        $region23: #{tpu_custom_call.1} parent=19 // pred_region
          %s144 = sand.u32 %s39, 1
          %s145 = scalar_lea.sflag [#allocation3], %s144
          %s146 = sand.u32 %s39, 1
          %s147 = smul.addr %s146, 8
          %s148 = scalar_lea.vmem [#allocation2], %s147
          %s150 = ssub.s32 128, 128
          %151 = vsyncadd %s145, %s150
          %s152 = sadd.s32 %s22, %s23
          %s153 = smul.addr %s152, 128
          %s154 = scalar_lea.hbm %s0, %s153
          %s156 = sshll.u32 %s148, 4
          %s157 = int_to_ptr.vmem [resolvable:$true] %s156
          %159 = dma.hbm_to_vmem [thread:$0]  %s154, 128, %s157, %s145
        $region24: #{tpu_custom_call.1} parent=19 // pred_fallthru
          _
      $region20: #{tpu_custom_call.1} parent=5 // pred_fallthru
        _
      %p160 = scmp.le.s32.totalorder 1, %s15
      %p161 = scmp.lt.s32.totalorder %s15, 3
      %p162 = pnand %p160, %p161
      %p163 = pneg %p162
      // Predicated region
      $region25: #{tpu_custom_call.1} parent=5 // pred_check
        _
      $region26: #{tpu_custom_call.1} parent=5 // pred_check_branch
        %165 = sbr.rel (%p162) target = $region28
      $region27: #{tpu_custom_call.1} parent=5 // pred_region
        %s166 = ssub.s32 %s15, 1
        %s167 = sand.u32 %s42, 1
        %s168 = scalar_lea.sflag [#allocation3], %s167
        %s169 = sand.u32 %s42, 1
        %s170 = smul.addr %s169, 8
        %s171 = scalar_lea.vmem [#allocation2], %s170
        // Predicated region
        $region29: #{tpu_custom_call.1} parent=27 // pred_check
          %p172 = pneg %p55
        $region30: #{tpu_custom_call.1} parent=27 // pred_check_branch
          %174 = sbr.rel (%p172) target = $region32
        $region31: #{tpu_custom_call.1} parent=27 // pred_region
          %175 = dma.done %s168, 128
        $region32: #{tpu_custom_call.1} parent=27 // pred_fallthru
          _
        // Predicated region
        $region33: #{tpu_custom_call.1} parent=27 // pred_check
          %p176 = pneg %p81
        $region34: #{tpu_custom_call.1} parent=27 // pred_check_branch
          %178 = sbr.rel (%p176) target = $region36
        $region35: #{tpu_custom_call.1} parent=27 // pred_region
          %179 = dma.done [#allocation6], 128
        $region36: #{tpu_custom_call.1} parent=27 // pred_fallthru
          _
        %s180 = sand.u32 %s42, 1
        %s181 = scalar_lea.sflag [#allocation3], %s180
        %s182 = sand.u32 %s42, 1
        %s183 = smul.addr %s182, 8
        %s184 = scalar_lea.vmem [#allocation2], %s183
        %p185 = pneg %p55
        %p186 = pneg %p52
        %p187 = pneg %p81
        %p188 = pneg %p78
        %p189 = pneg %p109
        %p190 = pneg %p106
        %s191 = sand.u32 %s96, 1
        %s192 = scalar_lea.sflag [#allocation4], %s191
        %s193 = sand.u32 %s96, 1
        %s194 = smul.addr %s193, 16
        %s195 = scalar_lea.vmem [#allocation7], %s194
        %v196 = vld [vmem:[%s171] sm:$0xff]
        %197 = vst [vmem:[%s195] sm:$0xff] %v196
        %v198 = vld [vmem:[#allocation5] sm:$0xff]
        %199 = vst [vmem:[%s195 + $0x8] sm:$0xff] %v198
        %s200 = sand.u32 %s96, 1
        %s201 = scalar_lea.sflag [#allocation4], %s200
        %s202 = sand.u32 %s96, 1
        %s203 = smul.addr %s202, 16
        %s204 = scalar_lea.vmem [#allocation7], %s203
        // Predicated region
        $region37: #{tpu_custom_call.1} parent=27 // pred_check
          %p205 = pneg %p106
        $region38: #{tpu_custom_call.1} parent=27 // pred_check_branch
          %207 = sbr.rel (%p205) target = $region40
        $region39: #{tpu_custom_call.1} parent=27 // pred_region
          %s209 = ssub.s32 256, 256
          %210 = vsyncadd %s201, %s209
          %s211 = smul.addr %s24, 2
          %s212 = smul.addr %s25, 2
          %s213 = sadd.s32 %s211, %s212
          %s214 = smul.addr %s213, 128
          %s215 = scalar_lea.hbm %s2, %s214
          %s217 = sshll.u32 %s204, 4
          %s218 = int_to_ptr.vmem [resolvable:$true] %s217
          %220 = dma.vmem_to_hbm [thread:$0]  %s218, 256, %s215, %s201
        $region40: #{tpu_custom_call.1} parent=27 // pred_fallthru
          _
      $region28: #{tpu_custom_call.1} parent=5 // pred_fallthru
        _
      %p221 = scmp.le.s32.totalorder 2, %s15
      // Predicated region
      $region41: #{tpu_custom_call.1} parent=5 // pred_check
        %p222 = pneg %p221
      $region42: #{tpu_custom_call.1} parent=5 // pred_check_branch
        %224 = sbr.rel (%p222) target = $region44
      $region43: #{tpu_custom_call.1} parent=5 // pred_region
        %s225 = ssub.s32 %s15, 2
        // Predicated region
        $region45: #{tpu_custom_call.1} parent=43 // pred_check
          %p226 = pneg %p112
        $region46: #{tpu_custom_call.1} parent=43 // pred_check_branch
          %228 = sbr.rel (%p226) target = $region48
        $region47: #{tpu_custom_call.1} parent=43 // pred_region
          %s229 = sand.u32 %s97, 1
          %s230 = scalar_lea.sflag [#allocation4], %s229
          %s231 = sand.u32 %s97, 1
          %s232 = smul.addr %s231, 16
          %s233 = scalar_lea.vmem [#allocation7], %s232
          %234 = dma.done %s230, 256
        $region48: #{tpu_custom_call.1} parent=43 // pred_fallthru
          _
      $region44: #{tpu_custom_call.1} parent=5 // pred_fallthru
        _
    $region6: #{tpu_custom_call.1} parent=1 // loop_footer
      %s19 = sadd.s32 1, %s15
    $region7: #{tpu_custom_call.1} parent=1 // loop_footer_branch
      %14 = sbr.rel target = $region3
    $region8: #{tpu_custom_call.1} parent=1 // loop_exit
      _
    %235 = vsyncpa [#allocation3], 1
    %s236 = scalar_lea.sflag [#allocation3], 1
    %237 = vsyncpa %s236, 1
    %238 = vsyncpa [#allocation6], 1
    %239 = vsyncpa [#allocation4], 1
    %s240 = scalar_lea.sflag [#allocation4], 1
    %241 = vsyncpa %s240, 1

</llo_original>
